<compile_context>
chip_gen: v6e
topology: v6e:2x2x1
jax: 0.10.0
libtpu: 0.0.40
codegen_flags: <defaults>
</compile_context>

<pallas_src>
import math

import jax
import jax.numpy as jnp
from jax.experimental import pallas as pl
from jax.experimental.pallas import tpu as pltpu


D = 224                 # in_features == out_features so the shared linear applies twice
TM_MAX = 1024           # max rows per grid step (VMEM/step stays ~7.5 MiB at f32)
MIN_PARALLEL_ROWS = 256 # below this, a single full block (one fat step)


def fused_linear_clamp_linear_kernel(x_ref, w_ref, b_ref, o_ref):
    x = x_ref[...]                                   # (TM, D)
    w = w_ref[...]                                   # (D, D), resident across grid
    b = b_ref[...]                                   # (1, D)
    # v1 = self.linear(x1)
    v1 = jnp.dot(x, w, preferred_element_type=jnp.float32) + b
    # v2 = clamp_min(v1, -5); v3 = clamp_max(v2, 5)
    v3 = jnp.clip(v1, -5.0, 5.0)
    # v4 = self.linear(v3)   (same shared weight/bias)
    v4 = jnp.dot(v3.astype(w.dtype), w, preferred_element_type=jnp.float32) + b
    o_ref[...] = v4.astype(o_ref.dtype)


@jax.jit
def model_forward(x, w, b):
    """x: (B, D) f32, w: (D_in, D_out) f32 (transposed PyTorch weight), b: (D_out,) f32."""
    B, Din = x.shape
    Dout = w.shape[1]
    b2 = b.reshape(1, Dout)

    # --- row tiling (static under jit) ---
    if B < MIN_PARALLEL_ROWS:
        TM, n_steps = B, 1                           # single full block (e.g. B=1)
    else:
        n_steps = max(2, pl.cdiv(B, TM_MAX))         # >=2 parallel steps for v7x megacore
        TM = pl.cdiv(pl.cdiv(B, n_steps), 8) * 8     # sublane-aligned, minimal waste
    Bp = n_steps * TM
    xp = x if Bp == B else jnp.pad(x, ((0, Bp - B), (0, 0)))   # at most 8*n_steps-1 rows

    # advisory cost hint: two (Bp x D) @ (D x D) matmuls + weight/act traffic
    cost = pl.CostEstimate(
        flops=2 * 2 * Bp * Din * Dout,
        transcendentals=0,
        bytes_accessed=(Din * Dout + Dout + 2 * Bp * Dout) * 4,
    )

    out = pl.pallas_call(
        fused_linear_clamp_linear_kernel,
        out_shape=jax.ShapeDtypeStruct((Bp, Dout), x.dtype),
        grid=(n_steps,),
        in_specs=[
            pl.BlockSpec((TM, Din), lambda i: (i, 0)),               # activation tile
            pl.BlockSpec((Din, Dout), lambda i: (0, 0),
                         pipeline_mode=pl.Buffered(1)),              # weight, resident
            pl.BlockSpec((1, Dout), lambda i: (0, 0),
                         pipeline_mode=pl.Buffered(1)),              # bias, resident
        ],
        out_specs=pl.BlockSpec((TM, Dout), lambda i: (i, 0)),
        compiler_params=pltpu.CompilerParams(
            dimension_semantics=("parallel",),                       # megacore split on v7x
        ),
        cost_estimate=cost,
    )(xp, w, b2)

    return out if Bp == B else out[:B]


def reference_forward(x, w, b):
    v1 = x @ w + b
    v3 = jnp.clip(v1, -5.0, 5.0)
    return v3 @ w + b


if __name__ == "__main__":
    key = jax.random.PRNGKey(0)
    kx, kw, kb, kx2 = jax.random.split(key, 4)

    # Deterministic Linear init (PyTorch-style uniform(-1/sqrt(fan_in), 1/sqrt(fan_in)))
    bound = 1.0 / math.sqrt(D)
    w = jax.random.uniform(kw, (D, D), dtype=jnp.float32, minval=-bound, maxval=bound)
    b = jax.random.uniform(kb, (D,), dtype=jnp.float32, minval=-bound, maxval=bound)

    # Case 1: matches the module's x1 = torch.randn(1, 224)  (single full-block path)
    x1 = jax.random.normal(kx, (1, D), dtype=jnp.float32)
    out1 = jax.block_until_ready(model_forward(x1, w, b))
    ref1 = reference_forward(x1, w, b)
    assert out1.shape == (1, D) and out1.dtype == jnp.float32
    assert jnp.allclose(out1, ref1, atol=1e-4, rtol=1e-4), "mismatch vs JAX reference (B=1)"

    # Case 2: larger batch exercising the 2-step tiled path (TM=200, no wasted rows)
    x2 = jax.random.normal(kx2, (400, D), dtype=jnp.float32)
    out2 = jax.block_until_ready(model_forward(x2, w, b))
    ref2 = reference_forward(x2, w, b)
    assert out2.shape == (400, D) and out2.dtype == jnp.float32
    assert jnp.allclose(out2, ref2, atol=1e-4, rtol=1e-4), "mismatch vs JAX reference (B=400)"

    print("KERNEL_OK")
</pallas_src>

<mosaic_0001>
module attributes {stable_mosaic.version = 11 : i64} {
  func.func @fused_linear_clamp_linear_kernel(%arg0: i32, %arg1: memref<1x224xf32, #tpu.memory_space<vmem>>, %arg2: memref<224x224xf32, #tpu.memory_space<vmem>>, %arg3: memref<1x224xf32, #tpu.memory_space<vmem>>, %arg4: memref<1x224xf32, #tpu.memory_space<vmem>>) attributes {dimension_semantics = [#tpu.dimension_semantics<parallel>], iteration_bounds = array<i64: 1>, scalar_prefetch = 0 : i64, scratch_operands = 0 : i64, tpu.core_type = #tpu.core_type<tc>, window_params = [{transform_indices = @transform_0, window_bounds = array<i64: 1, 224>}, {pipeline_mode = #tpu.pipeline_mode<synchronous>, transform_indices = @transform_1, window_bounds = array<i64: 224, 224>}, {pipeline_mode = #tpu.pipeline_mode<synchronous>, transform_indices = @transform_2, window_bounds = array<i64: 1, 224>}, {transform_indices = @transform_3, window_bounds = array<i64: 1, 224>}]} {
    %c0 = arith.constant 0 : index
    %c0_0 = arith.constant 0 : index
    %0 = vector.load %arg1[%c0, %c0_0] : memref<1x224xf32, #tpu.memory_space<vmem>>, vector<1x224xf32>
    %c0_1 = arith.constant 0 : index
    %c0_2 = arith.constant 0 : index
    %1 = vector.load %arg2[%c0_1, %c0_2] : memref<224x224xf32, #tpu.memory_space<vmem>>, vector<224x224xf32>
    %c0_3 = arith.constant 0 : index
    %c0_4 = arith.constant 0 : index
    %2 = vector.load %arg3[%c0_3, %c0_4] : memref<1x224xf32, #tpu.memory_space<vmem>>, vector<1x224xf32>
    %cst = arith.constant dense<0.000000e+00> : vector<1x224xf32>
    %3 = tpu.matmul %0, %1, %cst {dimension_numbers = #tpu.dot_dimension_numbers<[1], [0], [0], [1], [0, 0, 1, 1], [], []>} : vector<1x224xf32>, vector<224x224xf32>, vector<1x224xf32> -> vector<1x224xf32>
    %4 = arith.addf %3, %2 : vector<1x224xf32>
    %cst_5 = arith.constant -5.000000e+00 : f32
    %cst_6 = arith.constant 5.000000e+00 : f32
    %5 = vector.broadcast %cst_5 : f32 to vector<1x224xf32>
    %6 = arith.maximumf %5, %4 : vector<1x224xf32>
    %7 = vector.broadcast %cst_6 : f32 to vector<1x224xf32>
    %8 = arith.minimumf %7, %6 : vector<1x224xf32>
    %cst_7 = arith.constant dense<0.000000e+00> : vector<1x224xf32>
    %9 = tpu.matmul %8, %1, %cst_7 {dimension_numbers = #tpu.dot_dimension_numbers<[1], [0], [0], [1], [0, 0, 1, 1], [], []>} : vector<1x224xf32>, vector<224x224xf32>, vector<1x224xf32> -> vector<1x224xf32>
    %10 = arith.addf %9, %2 : vector<1x224xf32>
    %c0_8 = arith.constant 0 : index
    %c0_9 = arith.constant 0 : index
    %11 = vector.load %arg4[%c0_8, %c0_9] : memref<1x224xf32, #tpu.memory_space<vmem>>, vector<1x224xf32>
    tpu.vector_store %arg4[%c0_8, %c0_9], %10 {strides = array<i32>} : memref<1x224xf32, #tpu.memory_space<vmem>>, vector<1x224xf32>,
    return
  }
  func.func @transform_0(%arg0: i32) -> (i32, i32) {
    %c0_i32 = arith.constant 0 : i32
    %c0_i32_0 = arith.constant 0 : i32
    return %arg0, %c0_i32 : i32, i32
  }
  func.func @transform_1(%arg0: i32) -> (i32, i32) {
    %c0_i32 = arith.constant 0 : i32
    %c0_i32_0 = arith.constant 0 : i32
    %c0_i32_1 = arith.constant 0 : i32
    return %c0_i32, %c0_i32_0 : i32, i32
  }
  func.func @transform_2(%arg0: i32) -> (i32, i32) {
    %c0_i32 = arith.constant 0 : i32
    %c0_i32_0 = arith.constant 0 : i32
    %c0_i32_1 = arith.constant 0 : i32
    return %c0_i32, %c0_i32_0 : i32, i32
  }
  func.func @transform_3(%arg0: i32) -> (i32, i32) {
    %c0_i32 = arith.constant 0 : i32
    %c0_i32_0 = arith.constant 0 : i32
    return %arg0, %c0_i32 : i32, i32
  }
}

</mosaic_0001>

<llo_original>
// kernel: model_forward.1
$region0: #{model_forward.1}
  #allocation0 [shape = 'u32[]', space=smem, size = 0x4, offset = 0x4, fixed_abs, tag = 'smem constant byte address 0x4 - core index']
  #allocation1 [shape = 'u32[144,128]{1,0:T(1,128)}', space=vmem, size = 0x12000, scoped, tag = 'internal scratch']
  %s0 = inlined_call_operand.hbm [shape: f32[1,224], index: 0, kind: input, shape index: {}]
  %s1 = inlined_call_operand.hbm [shape: f32[224,224], index: 1, kind: input, shape index: {}]
  %s2 = inlined_call_operand.vmem [shape: f32[1,224], index: 2, kind: input, shape index: {}]
  %s3 = inlined_call_operand.hbm [shape: f32[1,224], index: 3, kind: output, shape index: {}]
  %s4 = sld [smem:[#allocation0]]
  $region30: #{model_forward.1} parent=0
    _
  %s6 = ssub.s32 1, %s4
  %s7 = scalar_select 0, %s6, %s4
  $region1: #{model_forward.1} parent=0
    #allocation2 [shape = 'u8[1024]{0}', space=vmem, size = 0x400, scoped, tag = 'input window, operand 0, single buffered']
    #allocation3 [shape = 's32[1]{0}', space=sflag, size = 0x4, scoped, tag = 'scoped memory for model_forward.1']
    #allocation4 [shape = 's32[1]{0}', space=sflag, size = 0x4, scoped, tag = 'scoped memory for model_forward.1']
    #allocation5 [shape = 'u8[229376]{0}', space=vmem, size = 0x38000, scoped, tag = 'input window, operand 1, single buffered']
    #allocation6 [shape = 's32[1]{0}', space=sflag, size = 0x4, scoped, tag = 'scoped memory for model_forward.1']
    #allocation7 [shape = 'u8[1024]{0}', space=vmem, size = 0x400, scoped, tag = 'output window, operand 0, single buffered']
    %8 = vsyncpa [#allocation3], 0
    %9 = vsyncpa [#allocation6], 0
    %10 = vsyncpa [#allocation4], 0
    // Predicated region
    $region2: #{model_forward.1} parent=1 // pred_check
      _
    $region3: #{model_forward.1} parent=1 // pred_check_branch
      %12 = sbr.rel (0) target = $region5
    $region4: #{model_forward.1} parent=1 // pred_region
      %s14 = ssub.s32 32, 32
      %15 = vsyncadd [#allocation3], %s14
      %s17 = sshll.u32 [#allocation2], 4
      %s18 = int_to_ptr.vmem [resolvable:$true] %s17
      %20 = dma.hbm_to_vmem [thread:$0]  %s0, 32, %s18, [#allocation3]
    $region5: #{model_forward.1} parent=1 // pred_fallthru
      _
    // Predicated region
    $region6: #{model_forward.1} parent=1 // pred_check
      _
    $region7: #{model_forward.1} parent=1 // pred_check_branch
      %22 = sbr.rel (0) target = $region9
    $region8: #{model_forward.1} parent=1 // pred_region
      %s24 = ssub.s32 7168, 7168
      %25 = vsyncadd [#allocation6], %s24
      %s26 = sshll.u32 [#allocation5], 4
      %s27 = int_to_ptr.vmem [resolvable:$true] %s26
      %32 = dma.hbm_to_vmem [thread:$0]  %s1, 7168, %s27, [#allocation6], 256, 256, 16
    $region9: #{model_forward.1} parent=1 // pred_fallthru
      _
    // Predicated region
    $region10: #{model_forward.1} parent=1 // pred_check
      _
    $region11: #{model_forward.1} parent=1 // pred_check_branch
      %34 = sbr.rel (0) target = $region13
    $region12: #{model_forward.1} parent=1 // pred_region
      _
    $region13: #{model_forward.1} parent=1 // pred_fallthru
      _
    // Predicated region
    $region14: #{model_forward.1} parent=1 // pred_check
      _
    $region15: #{model_forward.1} parent=1 // pred_check_branch
      %36 = sbr.rel (0) target = $region17
    $region16: #{model_forward.1} parent=1 // pred_region
      %37 = dma.done [#allocation3], 32
    $region17: #{model_forward.1} parent=1 // pred_fallthru
      _
    // Predicated region
    $region18: #{model_forward.1} parent=1 // pred_check
      _
    $region19: #{model_forward.1} parent=1 // pred_check_branch
      %39 = sbr.rel (0) target = $region21
    $region20: #{model_forward.1} parent=1 // pred_region
      %40 = dma.done [#allocation6], 7168
    $region21: #{model_forward.1} parent=1 // pred_fallthru
      _
    %v41 = vld [vmem:[#allocation2] sm:$0x3]
    %v42 = vld [vmem:[#allocation5] sm:$0xff]
    %v43 = vld [vmem:[#allocation5 + $0x8] sm:$0xff]
    %v44 = vld [vmem:[#allocation5 + $0x10] sm:$0xff]
    %v45 = vld [vmem:[#allocation5 + $0x18] sm:$0xff]
    %v46 = vld [vmem:[#allocation5 + $0x20] sm:$0xff]
    %v47 = vld [vmem:[#allocation5 + $0x28] sm:$0xff]
    %v48 = vld [vmem:[#allocation5 + $0x30] sm:$0xff]
    %v49 = vld [vmem:[#allocation5 + $0x38] sm:$0xff]
    %v50 = vld [vmem:[#allocation5 + $0x40] sm:$0xff]
    %v51 = vld [vmem:[#allocation5 + $0x48] sm:$0xff]
    %v52 = vld [vmem:[#allocation5 + $0x50] sm:$0xff]
    %v53 = vld [vmem:[#allocation5 + $0x58] sm:$0xff]
    %v54 = vld [vmem:[#allocation5 + $0x60] sm:$0xff]
    %v55 = vld [vmem:[#allocation5 + $0x68] sm:$0xff]
    %v56 = vld [vmem:[#allocation5 + $0x70] sm:$0xff]
    %v57 = vld [vmem:[#allocation5 + $0x78] sm:$0xff]
    %v58 = vld [vmem:[#allocation5 + $0x80] sm:$0xff]
    %v59 = vld [vmem:[#allocation5 + $0x88] sm:$0xff]
    %v60 = vld [vmem:[#allocation5 + $0x90] sm:$0xff]
    %v61 = vld [vmem:[#allocation5 + $0x98] sm:$0xff]
    %v62 = vld [vmem:[#allocation5 + $0xa0] sm:$0xff]
    %v63 = vld [vmem:[#allocation5 + $0xa8] sm:$0xff]
    %v64 = vld [vmem:[#allocation5 + $0xb0] sm:$0xff]
    %v65 = vld [vmem:[#allocation5 + $0xb8] sm:$0xff]
    %v66 = vld [vmem:[#allocation5 + $0xc0] sm:$0xff]
    %v67 = vld [vmem:[#allocation5 + $0xc8] sm:$0xff]
    %v68 = vld [vmem:[#allocation5 + $0xd0] sm:$0xff]
    %v69 = vld [vmem:[#allocation5 + $0xd8] sm:$0xff]
    %v70 = vld [vmem:[#allocation5 + $0xe0] sm:$0xff]
    %v71 = vld [vmem:[#allocation5 + $0xe8] sm:$0xff]
    %v72 = vld [vmem:[#allocation5 + $0xf0] sm:$0xff]
    %v73 = vld [vmem:[#allocation5 + $0xf8] sm:$0xff]
    %v74 = vld [vmem:[#allocation5 + $0x100] sm:$0xff]
    %v75 = vld [vmem:[#allocation5 + $0x108] sm:$0xff]
    %v76 = vld [vmem:[#allocation5 + $0x110] sm:$0xff]
    %v77 = vld [vmem:[#allocation5 + $0x118] sm:$0xff]
    %v78 = vld [vmem:[#allocation5 + $0x120] sm:$0xff]
    %v79 = vld [vmem:[#allocation5 + $0x128] sm:$0xff]
    %v80 = vld [vmem:[#allocation5 + $0x130] sm:$0xff]
    %v81 = vld [vmem:[#allocation5 + $0x138] sm:$0xff]
    %v82 = vld [vmem:[#allocation5 + $0x140] sm:$0xff]
    %v83 = vld [vmem:[#allocation5 + $0x148] sm:$0xff]
    %v84 = vld [vmem:[#allocation5 + $0x150] sm:$0xff]
    %v85 = vld [vmem:[#allocation5 + $0x158] sm:$0xff]
    %v86 = vld [vmem:[#allocation5 + $0x160] sm:$0xff]
    %v87 = vld [vmem:[#allocation5 + $0x168] sm:$0xff]
    %v88 = vld [vmem:[#allocation5 + $0x170] sm:$0xff]
    %v89 = vld [vmem:[#allocation5 + $0x178] sm:$0xff]
    %v90 = vld [vmem:[#allocation5 + $0x180] sm:$0xff]
    %v91 = vld [vmem:[#allocation5 + $0x188] sm:$0xff]
    %v92 = vld [vmem:[#allocation5 + $0x190] sm:$0xff]
    %v93 = vld [vmem:[#allocation5 + $0x198] sm:$0xff]
    %v94 = vld [vmem:[#allocation5 + $0x1a0] sm:$0xff]
    %v95 = vld [vmem:[#allocation5 + $0x1a8] sm:$0xff]
    %v96 = vld [vmem:[#allocation5 + $0x1b0] sm:$0xff]
    %v97 = vld [vmem:[#allocation5 + $0x1b8] sm:$0xff]
    %v98 = vld [vmem:[%s2] sm:$0x3]
    %v100 = vlaneseq
    %v101 = vshrl.u32 %v100, 7
    %v102 = vsub.s32 0, %v101
    %v103 = vrot.slane %v41, %v102
    %v104 = vlaneseq
    %v105 = vshrl.u32 %v104, 7
    %v106 = vsub.s32 1, %v105
    %v107 = vrot.slane %v41, %v106
    %v110 = vlaneseq
    %v111 = vshrl.u32 %v110, 7
    %v112 = vsub.s32 0, %v111
    %v113 = vrot.slane %v98, %v112
    %v114 = vlaneseq
    %v115 = vshrl.u32 %v114, 7
    %v116 = vsub.s32 1, %v115
    %v117 = vrot.slane %v98, %v116
    %vm120 = vcmask 785408
    %v121 = vsel %vm120, %v107, 0
    %123 = vmatprep.subr.mxu0 %v73
    %124 = vmatpush1.msra.mxu0 %v72
    %125 = vmatprep.subr.mxu0 %v71
    %126 = vmatpush1.msra.mxu0 %v70
    %127 = vmatprep.subr.mxu0 %v69
    %128 = vmatpush1.msra.mxu0 %v68
    %129 = vmatprep.subr.mxu0 %v67
    %130 = vmatpush1.msra.mxu0 %v66
    %131 = vmatprep.subr.mxu0 %v65
    %132 = vmatpush1.msra.mxu0 %v64
    %133 = vmatprep.subr.mxu0 %v63
    %134 = vmatpush1.msra.mxu0 %v62
    %135 = vmatprep.subr.mxu0 %v61
    %136 = vmatpush1.msra.mxu0 %v60
    %137 = vmatprep.subr.mxu0 %v59
    %138 = vmatpush1.msra.mxu0 %v58
    %139 = vmatprep.subr.mxu0 %v57
    %140 = vmatpush1.msra.mxu0 %v56
    %141 = vmatprep.subr.mxu0 %v55
    %142 = vmatpush1.msra.mxu0 %v54
    %143 = vmatprep.subr.mxu0 %v53
    %144 = vmatpush1.msra.mxu0 %v52
    %145 = vmatprep.subr.mxu0 %v51
    %146 = vmatpush1.msra.mxu0 %v50
    %147 = vmatprep.subr.mxu0 %v49
    %148 = vmatpush1.msra.mxu0 %v48
    %149 = vmatprep.subr.mxu0 %v47
    %150 = vmatpush1.msra.mxu0 %v46
    %151 = vmatprep.subr.mxu0 %v45
    %152 = vmatpush1.msra.mxu0 %v44
    %153 = vmatprep.subr.mxu0 %v43
    %154 = vmatpush1.msra.mxu0 %v42
    %155 = vmatprep.subr.mxu0 0.0
    %156 = vmatpush2.msra.mxu0 0.0
    %157 = vmatprep.subr.mxu0 0.0
    %158 = vmatpush2.msra.mxu0 0.0
    %159 = vmatprep.subr.mxu0 0.0
    %160 = vmatpush2.msra.mxu0 0.0
    %161 = vmatprep.subr.mxu0 0.0
    %162 = vmatpush2.msra.mxu0 0.0
    %163 = vmatprep.subr.mxu0 %v97
    %164 = vmatpush2.msra.mxu0 %v96
    %165 = vmatprep.subr.mxu0 %v95
    %166 = vmatpush2.msra.mxu0 %v94
    %167 = vmatprep.subr.mxu0 %v93
    %168 = vmatpush2.msra.mxu0 %v92
    %169 = vmatprep.subr.mxu0 %v91
    %170 = vmatpush2.msra.mxu0 %v90
    %171 = vmatprep.subr.mxu0 %v89
    %172 = vmatpush2.msra.mxu0 %v88
    %173 = vmatprep.subr.mxu0 %v87
    %174 = vmatpush2.msra.mxu0 %v86
    %175 = vmatprep.subr.mxu0 %v85
    %176 = vmatpush2.msra.mxu0 %v84
    %177 = vmatprep.subr.mxu0 %v83
    %178 = vmatpush2.msra.mxu0 %v82
    %179 = vmatprep.subr.mxu0 %v81
    %180 = vmatpush2.msra.mxu0 %v80
    %181 = vmatprep.subr.mxu0 %v79
    %182 = vmatpush2.msra.mxu0 %v78
    %183 = vmatprep.subr.mxu0 %v77
    %184 = vmatpush2.msra.mxu0 %v76
    %185 = vmatprep.subr.mxu0 %v75
    %186 = vmatpush2.msra.mxu0 %v74
    %187 = vmatprep.mubr.f32.mxu0 %v121
    %188 = vmatmul.mubr.f32.gmra.mxu0 %v103
    %v189 = vpop.f32.mrf.mxu0
    %v190 = vadd.f32 %v113, %v189
    %v191 = vpop.f32.mrf.mxu0
    %v192 = vadd.f32 %v117, %v191
    %193 = vdwg.mxu0
    %v194 = vmax.f32 %v190, -5.0
    %v195 = vmax.f32 %v192, -5.0
    %v196 = vmin.f32 %v194, 5.0
    %v197 = vmin.f32 %v195, 5.0
    %v199 = vsel %vm120, %v197, 0
    %201 = vmatprep.subr.mxu0 %v73
    %202 = vmatpush1.msra.mxu0 %v72
    %203 = vmatprep.subr.mxu0 %v71
    %204 = vmatpush1.msra.mxu0 %v70
    %205 = vmatprep.subr.mxu0 %v69
    %206 = vmatpush1.msra.mxu0 %v68
    %207 = vmatprep.subr.mxu0 %v67
    %208 = vmatpush1.msra.mxu0 %v66
    %209 = vmatprep.subr.mxu0 %v65
    %210 = vmatpush1.msra.mxu0 %v64
    %211 = vmatprep.subr.mxu0 %v63
    %212 = vmatpush1.msra.mxu0 %v62
    %213 = vmatprep.subr.mxu0 %v61
    %214 = vmatpush1.msra.mxu0 %v60
    %215 = vmatprep.subr.mxu0 %v59
    %216 = vmatpush1.msra.mxu0 %v58
    %217 = vmatprep.subr.mxu0 %v57
    %218 = vmatpush1.msra.mxu0 %v56
    %219 = vmatprep.subr.mxu0 %v55
    %220 = vmatpush1.msra.mxu0 %v54
    %221 = vmatprep.subr.mxu0 %v53
    %222 = vmatpush1.msra.mxu0 %v52
    %223 = vmatprep.subr.mxu0 %v51
    %224 = vmatpush1.msra.mxu0 %v50
    %225 = vmatprep.subr.mxu0 %v49
    %226 = vmatpush1.msra.mxu0 %v48
    %227 = vmatprep.subr.mxu0 %v47
    %228 = vmatpush1.msra.mxu0 %v46
    %229 = vmatprep.subr.mxu0 %v45
    %230 = vmatpush1.msra.mxu0 %v44
    %231 = vmatprep.subr.mxu0 %v43
    %232 = vmatpush1.msra.mxu0 %v42
    %233 = vmatprep.subr.mxu0 0.0
    %234 = vmatpush2.msra.mxu0 0.0
    %235 = vmatprep.subr.mxu0 0.0
    %236 = vmatpush2.msra.mxu0 0.0
    %237 = vmatprep.subr.mxu0 0.0
    %238 = vmatpush2.msra.mxu0 0.0
    %239 = vmatprep.subr.mxu0 0.0
    %240 = vmatpush2.msra.mxu0 0.0
    %241 = vmatprep.subr.mxu0 %v97
    %242 = vmatpush2.msra.mxu0 %v96
    %243 = vmatprep.subr.mxu0 %v95
    %244 = vmatpush2.msra.mxu0 %v94
    %245 = vmatprep.subr.mxu0 %v93
    %246 = vmatpush2.msra.mxu0 %v92
    %247 = vmatprep.subr.mxu0 %v91
    %248 = vmatpush2.msra.mxu0 %v90
    %249 = vmatprep.subr.mxu0 %v89
    %250 = vmatpush2.msra.mxu0 %v88
    %251 = vmatprep.subr.mxu0 %v87
    %252 = vmatpush2.msra.mxu0 %v86
    %253 = vmatprep.subr.mxu0 %v85
    %254 = vmatpush2.msra.mxu0 %v84
    %255 = vmatprep.subr.mxu0 %v83
    %256 = vmatpush2.msra.mxu0 %v82
    %257 = vmatprep.subr.mxu0 %v81
    %258 = vmatpush2.msra.mxu0 %v80
    %259 = vmatprep.subr.mxu0 %v79
    %260 = vmatpush2.msra.mxu0 %v78
    %261 = vmatprep.subr.mxu0 %v77
    %262 = vmatpush2.msra.mxu0 %v76
    %263 = vmatprep.subr.mxu0 %v75
    %264 = vmatpush2.msra.mxu0 %v74
    %265 = vmatprep.mubr.f32.mxu0 %v199
    %266 = vmatmul.mubr.f32.gmra.mxu0 %v196
    %v267 = vpop.f32.mrf.mxu0
    %v268 = vadd.f32 %v113, %v267
    %v269 = vpop.f32.mrf.mxu0
    %v270 = vadd.f32 %v117, %v269
    %271 = vdwg.mxu0
    %v274 = vcombine.low %v268, %v270
    %v276 = vunpack.c.l.s4 1966171168
    %v277 = vunpack.c.0.s8 %v276
    %v278 = vlaneseq
    %v279 = vshrl.u32 %v278, 7
    %v280 = vsub.s32 %v277, %v279
    %v281 = vrot.slane %v274, %v280
    %v283 = vunpack.c.l.s4 1966171168
    %v284 = vunpack.c.0.s8 %v283
    %v285 = vlaneseq
    %v286 = vshrl.u32 %v285, 7
    %v287 = vsub.s32 %v284, %v286
    %v288 = vrot.slane %v281, %v287
    %v290 = vlaneseq
    %vm291 = vcmp.ge.s32.totalorder %v290, 0
    %vm292 = vcmp.lt.s32.totalorder %v290, 224
    %vm293 = vmand %vm291, %vm292
    %294 = vst.msk [vmem:[#allocation7] sm:$0x3] %vm293, %v288
    // Predicated region
    $region22: #{model_forward.1} parent=1 // pred_check
      _
    $region23: #{model_forward.1} parent=1 // pred_check_branch
      %296 = sbr.rel (0) target = $region25
    $region24: #{model_forward.1} parent=1 // pred_region
      %s298 = ssub.s32 32, 32
      %299 = vsyncadd [#allocation4], %s298
      %s301 = sshll.u32 [#allocation7], 4
      %s302 = int_to_ptr.vmem [resolvable:$true] %s301
      %304 = dma.vmem_to_hbm [thread:$0]  %s302, 32, %s3, [#allocation4]
    $region25: #{model_forward.1} parent=1 // pred_fallthru
      _
    // Predicated region
    $region26: #{model_forward.1} parent=1 // pred_check
      _
    $region27: #{model_forward.1} parent=1 // pred_check_branch
      %306 = sbr.rel (0) target = $region29
    $region28: #{model_forward.1} parent=1 // pred_region
      %307 = dma.done [#allocation4], 32
    $region29: #{model_forward.1} parent=1 // pred_fallthru
      _
    %308 = vsyncpa [#allocation3], 1
    %309 = vsyncpa [#allocation6], 1
    %310 = vsyncpa [#allocation4], 1

</llo_original>
